<compile_context>
chip_gen: v7x
topology: tpu7x:2x2x1
jax: 0.10.0
libtpu: 0.0.40
codegen_flags: <defaults>
</compile_context>

<pallas_src>
import jax
import jax.numpy as jnp
from jax.experimental import pallas as pl
from jax.experimental.pallas import tpu as pltpu


VISUAL_OUT_DIM = 2048   # visual_output_dim in the module
HIDDEN_SIZE = 512       # hidden_size default in the module
NUM_CLASSES = 3
LANE = 128              # lane width; classifier output padded 3 -> 128
SUBLANE = 8


def _round_up(x, m):
    return ((x + m - 1) // m) * m


def _visual_only_kernel(img_ref, wcomb_ref, bf_ref, wcls_ref, bcls_ref,
                        out_ref, acc_ref):
    """Grid = (batch tiles, spatial tiles); spatial axis is the reduction.

    img_ref  : (TILE_N, C, TILE_S) f32  zero-padded image chunk (streamed)
    wcomb_ref: (C, HIDDEN)         f32  (w_vis / (H*W)) @ w_fc  (VMEM resident)
    bf_ref   : (1, HIDDEN)         f32  fc bias
    wcls_ref : (HIDDEN, LANE)      f32  classifier weight, zero-padded to 128 lanes
    bcls_ref : (1, LANE)           f32  classifier bias,  zero-padded to 128 lanes
    out_ref  : (TILE_N, LANE)      f32  padded logits block (resident across spatial axis)
    acc_ref  : (TILE_N, C)         f32  spatial-sum accumulator scratch
    """
    s = pl.program_id(1)

    @pl.when(s == 0)
    def _():
        acc_ref[...] = jnp.zeros_like(acc_ref)

    # Accumulate the spatial sum for this chunk.  The 1/(H*W) mean scale is
    # folded into wcomb on the host, and spatial zero-padding adds nothing.
    acc_ref[...] += jnp.sum(img_ref[...], axis=-1)

    @pl.when(s == pl.num_programs(1) - 1)
    def _():
        pooled = acc_ref[...]                                       # (TILE_N, C)
        # combined_features = self.fc(visual_features)   (backbone folded in)
        hidden = jnp.dot(pooled, wcomb_ref[...],
                         preferred_element_type=jnp.float32) + bf_ref[...]
        # logits = self.classifier(combined_features)  (lane-dense, padded)
        logits = jnp.dot(hidden, wcls_ref[...],
                         preferred_element_type=jnp.float32) + bcls_ref[...]
        out_ref[...] = logits


def visual_only_forward(image, w_vis, w_fc, b_fc, w_cls, b_cls,
                        *, tile_n_max=128, tile_s_max=512):
    """image: (N, C, H, W) float32 NCHW.  Returns logits (N, 3)."""
    n, c, h, w = image.shape
    s = h * w

    # ---- host-side, one-time weight prep (numerically identical) -----------
    # mean(img) @ w_vis @ w_fc + b_fc == sum(img) @ ((w_vis / (H*W)) @ w_fc) + b_fc
    w_comb = (w_vis.astype(jnp.float32) / float(s)) @ w_fc.astype(jnp.float32)
    b_fc2 = b_fc.reshape(1, HIDDEN_SIZE).astype(jnp.float32)
    # Lane-dense classifier: zero-pad 3 -> 128 output lanes (sliced after).
    w_cls_pad = jnp.zeros((HIDDEN_SIZE, LANE), jnp.float32)
    w_cls_pad = w_cls_pad.at[:, :NUM_CLASSES].set(w_cls.astype(jnp.float32))
    b_cls_pad = jnp.zeros((1, LANE), jnp.float32)
    b_cls_pad = b_cls_pad.at[:, :NUM_CLASSES].set(b_cls.reshape(1, -1).astype(jnp.float32))

    # ---- tiling / padding ---------------------------------------------------
    # Batch tile: 128 rows when the batch is large (MXU-height friendly on all
    # generations), otherwise pad the tiny batch up to a sublane multiple (8).
    if n >= tile_n_max:
        tile_n = tile_n_max
    else:
        tile_n = _round_up(n, SUBLANE)
    n_pad = _round_up(n, tile_n)

    # Spatial tile: lane-aligned chunks of the H*W axis (zero-padded).
    if s <= tile_s_max:
        tile_s = _round_up(s, LANE)
    else:
        tile_s = tile_s_max
    s_pad = _round_up(s, tile_s)

    img_flat = image.reshape(n, c, s).astype(jnp.float32)
    img_flat = jnp.pad(img_flat, ((0, n_pad - n), (0, 0), (0, s_pad - s)))

    grid = (n_pad // tile_n, s_pad // tile_s)

    out_pad = pl.pallas_call(
        _visual_only_kernel,
        out_shape=jax.ShapeDtypeStruct((n_pad, LANE), jnp.float32),
        grid_spec=pltpu.PrefetchScalarGridSpec(
            num_scalar_prefetch=0,
            grid=grid,
            in_specs=[
                # image streams per (batch tile, spatial tile)
                pl.BlockSpec((tile_n, c, tile_s), lambda i, k: (i, 0, k)),
                # weights / biases: constant block index -> VMEM resident
                pl.BlockSpec((c, HIDDEN_SIZE), lambda i, k: (0, 0)),
                pl.BlockSpec((1, HIDDEN_SIZE), lambda i, k: (0, 0)),
                pl.BlockSpec((HIDDEN_SIZE, LANE), lambda i, k: (0, 0)),
                pl.BlockSpec((1, LANE), lambda i, k: (0, 0)),
            ],
            # output block resident across the spatial (reduction) axis
            out_specs=pl.BlockSpec((tile_n, LANE), lambda i, k: (i, 0)),
            scratch_shapes=[pltpu.VMEM((tile_n, c), jnp.float32)],
        ),
        compiler_params=pltpu.CompilerParams(
            dimension_semantics=("parallel", "arbitrary"),
            vmem_limit_bytes=48 << 20,   # headroom for v7x's 64 MiB physical VMEM
        ),
    )(img_flat, w_comb, b_fc2, w_cls_pad, b_cls_pad)

    return out_pad[:n, :NUM_CLASSES]


def _reference_forward(image, w_vis, w_fc, b_fc, w_cls, b_cls):
    n, c, h, w = image.shape
    pooled = jnp.mean(image.reshape(n, c, h * w), axis=-1)
    feat = pooled @ w_vis
    hidden = feat @ w_fc + b_fc.reshape(1, -1)
    return hidden @ w_cls + b_cls.reshape(1, -1)


if __name__ == "__main__":
    key = jax.random.PRNGKey(0)
    k_img, k_wv, k_wf, k_bf, k_wc, k_bc = jax.random.split(key, 6)

    N, C, H, W = 2, 4, 16, 16
    image = jax.random.normal(k_img, (N, C, H, W), dtype=jnp.float32)

    # Deterministic synthetic parameters (no checkpoint load).
    # TODO(synk): real ResNet-style visual_model backbone is external/undefined;
    # replaced by a fixed GAP + linear projection producing 2048-dim features.
    w_vis = jax.random.normal(k_wv, (C, VISUAL_OUT_DIM), dtype=jnp.float32) * 0.05
    w_fc = jax.random.normal(k_wf, (VISUAL_OUT_DIM, HIDDEN_SIZE), dtype=jnp.float32) * 0.02
    b_fc = jax.random.normal(k_bf, (HIDDEN_SIZE,), dtype=jnp.float32) * 0.01
    w_cls = jax.random.normal(k_wc, (HIDDEN_SIZE, NUM_CLASSES), dtype=jnp.float32) * 0.02
    b_cls = jax.random.normal(k_bc, (NUM_CLASSES,), dtype=jnp.float32) * 0.01

    # tile_s_max=128 forces a 2-step spatial reduction so the accumulator /
    # pl.when init/finalize path is exercised even at this tiny test shape.
    logits = visual_only_forward(image, w_vis, w_fc, b_fc, w_cls, b_cls,
                                 tile_s_max=128)
    logits = jax.block_until_ready(logits)

    ref = _reference_forward(image, w_vis, w_fc, b_fc, w_cls, b_cls)
    assert logits.shape == (N, NUM_CLASSES)
    assert jnp.allclose(logits, ref, atol=1e-4, rtol=1e-4), "mismatch vs reference"

    print("KERNEL_OK")
</pallas_src>

<mosaic_0001>
module attributes {stable_mosaic.version = 11 : i64} {
  func.func @_visual_only_kernel(%arg0: i32, %arg1: i32, %arg2: memref<8x4x128xf32, #tpu.memory_space<vmem>>, %arg3: memref<4x512xf32, #tpu.memory_space<vmem>>, %arg4: memref<1x512xf32, #tpu.memory_space<vmem>>, %arg5: memref<512x128xf32, #tpu.memory_space<vmem>>, %arg6: memref<1x128xf32, #tpu.memory_space<vmem>>, %arg7: memref<8x128xf32, #tpu.memory_space<vmem>>, %arg8: memref<8x4xf32, #tpu.memory_space<vmem>>) attributes {dimension_semantics = [#tpu.dimension_semantics<parallel>, #tpu.dimension_semantics<arbitrary>], iteration_bounds = array<i64: 1, 2>, scalar_prefetch = 0 : i64, scratch_operands = 1 : i64, tpu.core_type = #tpu.core_type<tc>, window_params = [{transform_indices = @transform_0, window_bounds = array<i64: 8, 4, 128>}, {pipeline_mode = #tpu.pipeline_mode<synchronous>, transform_indices = @transform_1, window_bounds = array<i64: 4, 512>}, {pipeline_mode = #tpu.pipeline_mode<synchronous>, transform_indices = @transform_2, window_bounds = array<i64: 1, 512>}, {pipeline_mode = #tpu.pipeline_mode<synchronous>, transform_indices = @transform_3, window_bounds = array<i64: 512, 128>}, {pipeline_mode = #tpu.pipeline_mode<synchronous>, transform_indices = @transform_4, window_bounds = array<i64: 1, 128>}, {transform_indices = @transform_5, window_bounds = array<i64: 8, 128>}]} {
    %c0_i32 = arith.constant 0 : i32
    %0 = arith.cmpi eq, %arg1, %c0_i32 : i32
    %1 = arith.extui %0 : i1 to i32
    %c0_i32_0 = arith.constant 0 : i32
    %2 = arith.cmpi ne, %1, %c0_i32_0 : i32
    scf.if %2 {
      %cst_8 = arith.constant 0.000000e+00 : f32
      %11 = vector.broadcast %cst_8 : f32 to vector<8x4xf32>
      %c0_9 = arith.constant 0 : index
      %c0_10 = arith.constant 0 : index
      %12 = vector.load %arg8[%c0_9, %c0_10] : memref<8x4xf32, #tpu.memory_space<vmem>>, vector<8x4xf32>
      tpu.vector_store %arg8[%c0_9, %c0_10], %11 {strides = array<i32>} : memref<8x4xf32, #tpu.memory_space<vmem>>, vector<8x4xf32>,
    } else {
    }
    %c0 = arith.constant 0 : index
    %c0_1 = arith.constant 0 : index
    %3 = vector.load %arg8[%c0, %c0_1] : memref<8x4xf32, #tpu.memory_space<vmem>>, vector<8x4xf32>
    %c0_2 = arith.constant 0 : index
    %c0_3 = arith.constant 0 : index
    %c0_4 = arith.constant 0 : index
    %4 = vector.load %arg2[%c0_2, %c0_3, %c0_4] : memref<8x4x128xf32, #tpu.memory_space<vmem>>, vector<8x4x128xf32>
    %cst = arith.constant dense<0.000000e+00> : vector<8x4xf32>
    %5 = vector.multi_reduction <add>, %4, %cst [2] : vector<8x4x128xf32> to vector<8x4xf32>
    %6 = arith.addf %3, %5 : vector<8x4xf32>
    %c0_5 = arith.constant 0 : index
    %c0_6 = arith.constant 0 : index
    %7 = vector.load %arg8[%c0_5, %c0_6] : memref<8x4xf32, #tpu.memory_space<vmem>>, vector<8x4xf32>
    tpu.vector_store %arg8[%c0_5, %c0_6], %6 {strides = array<i32>} : memref<8x4xf32, #tpu.memory_space<vmem>>, vector<8x4xf32>,
    %c1_i32 = arith.constant 1 : i32
    %8 = arith.cmpi eq, %arg1, %c1_i32 : i32
    %9 = arith.extui %8 : i1 to i32
    %c0_i32_7 = arith.constant 0 : i32
    %10 = arith.cmpi ne, %9, %c0_i32_7 : i32
    scf.if %10 {
      %c0_8 = arith.constant 0 : index
      %c0_9 = arith.constant 0 : index
      %11 = vector.load %arg8[%c0_8, %c0_9] : memref<8x4xf32, #tpu.memory_space<vmem>>, vector<8x4xf32>
      %c0_10 = arith.constant 0 : index
      %c0_11 = arith.constant 0 : index
      %12 = vector.load %arg3[%c0_10, %c0_11] : memref<4x512xf32, #tpu.memory_space<vmem>>, vector<4x512xf32>
      %cst_12 = arith.constant dense<0.000000e+00> : vector<8x512xf32>
      %13 = tpu.matmul %11, %12, %cst_12 {dimension_numbers = #tpu.dot_dimension_numbers<[1], [0], [0], [1], [0, 0, 1, 1], [], []>} : vector<8x4xf32>, vector<4x512xf32>, vector<8x512xf32> -> vector<8x512xf32>
      %c0_13 = arith.constant 0 : index
      %c0_14 = arith.constant 0 : index
      %14 = vector.load %arg4[%c0_13, %c0_14] : memref<1x512xf32, #tpu.memory_space<vmem>>, vector<1x512xf32>
      %15 = vector.broadcast %14 : vector<1x512xf32> to vector<8x512xf32>
      %16 = arith.addf %13, %15 : vector<8x512xf32>
      %c0_15 = arith.constant 0 : index
      %c0_16 = arith.constant 0 : index
      %17 = vector.load %arg5[%c0_15, %c0_16] : memref<512x128xf32, #tpu.memory_space<vmem>>, vector<512x128xf32>
      %cst_17 = arith.constant dense<0.000000e+00> : vector<8x128xf32>
      %18 = tpu.matmul %16, %17, %cst_17 {dimension_numbers = #tpu.dot_dimension_numbers<[1], [0], [0], [1], [0, 0, 1, 1], [], []>} : vector<8x512xf32>, vector<512x128xf32>, vector<8x128xf32> -> vector<8x128xf32>
      %c0_18 = arith.constant 0 : index
      %c0_19 = arith.constant 0 : index
      %19 = vector.load %arg6[%c0_18, %c0_19] : memref<1x128xf32, #tpu.memory_space<vmem>>, vector<1x128xf32>
      %20 = vector.broadcast %19 : vector<1x128xf32> to vector<8x128xf32>
      %21 = arith.addf %18, %20 : vector<8x128xf32>
      %c0_20 = arith.constant 0 : index
      %c0_21 = arith.constant 0 : index
      %22 = vector.load %arg7[%c0_20, %c0_21] : memref<8x128xf32, #tpu.memory_space<vmem>>, vector<8x128xf32>
      tpu.vector_store %arg7[%c0_20, %c0_21], %21 {strides = array<i32>} : memref<8x128xf32, #tpu.memory_space<vmem>>, vector<8x128xf32>,
    } else {
    }
    return
  }
  func.func @transform_0(%arg0: i32, %arg1: i32) -> (i32, i32, i32) {
    %c0_i32 = arith.constant 0 : i32
    %c0_i32_0 = arith.constant 0 : i32
    return %arg0, %c0_i32, %arg1 : i32, i32, i32
  }
  func.func @transform_1(%arg0: i32, %arg1: i32) -> (i32, i32) {
    %c0_i32 = arith.constant 0 : i32
    %c0_i32_0 = arith.constant 0 : i32
    %c0_i32_1 = arith.constant 0 : i32
    return %c0_i32, %c0_i32_0 : i32, i32
  }
  func.func @transform_2(%arg0: i32, %arg1: i32) -> (i32, i32) {
    %c0_i32 = arith.constant 0 : i32
    %c0_i32_0 = arith.constant 0 : i32
    %c0_i32_1 = arith.constant 0 : i32
    return %c0_i32, %c0_i32_0 : i32, i32
  }
  func.func @transform_3(%arg0: i32, %arg1: i32) -> (i32, i32) {
    %c0_i32 = arith.constant 0 : i32
    %c0_i32_0 = arith.constant 0 : i32
    %c0_i32_1 = arith.constant 0 : i32
    return %c0_i32, %c0_i32_0 : i32, i32
  }
  func.func @transform_4(%arg0: i32, %arg1: i32) -> (i32, i32) {
    %c0_i32 = arith.constant 0 : i32
    %c0_i32_0 = arith.constant 0 : i32
    %c0_i32_1 = arith.constant 0 : i32
    return %c0_i32, %c0_i32_0 : i32, i32
  }
  func.func @transform_5(%arg0: i32, %arg1: i32) -> (i32, i32) {
    %c0_i32 = arith.constant 0 : i32
    %c0_i32_0 = arith.constant 0 : i32
    return %arg0, %c0_i32 : i32, i32
  }
}

</mosaic_0001>

<llo_original>
// kernel: tpu_custom_call.1
$region0: #{tpu_custom_call.1}
  #allocation0 [shape = 'u32[]', space=smem, size = 0x4, offset = 0x4, fixed_abs, tag = 'smem constant byte address 0x4 - core index']
  #allocation1 [shape = 'u32[144,128]{1,0:T(1,128)}', space=vmem, size = 0x12000, scoped, tag = 'internal scratch']
  #allocation2 [shape = 'f32[8,4]{1,0:T(8,128)}', space=vmem, size = 0x1000, scoped, tag = 'scratch operand']
  %s0 = inlined_call_operand.hbm [shape: f32[8,4,256], index: 0, kind: input, shape index: {}]
  %s1 = inlined_call_operand.hbm [shape: f32[4,512], index: 1, kind: input, shape index: {}]
  %s2 = inlined_call_operand.vmem [shape: f32[1,512], index: 2, kind: input, shape index: {}]
  %s3 = inlined_call_operand.hbm [shape: f32[512,128], index: 3, kind: input, shape index: {}]
  %s4 = inlined_call_operand.vmem [shape: f32[1,128], index: 4, kind: input, shape index: {}]
  %s5 = inlined_call_operand.hbm [shape: f32[8,128], index: 5, kind: output, shape index: {}]
  %s6 = sld [smem:[#allocation0]]
  $region73: #{tpu_custom_call.1} parent=0
    _
  %s8 = ssub.s32 1, %s6
  %s9 = scalar_select 0, %s8, %s6
  $region1: #{tpu_custom_call.1} parent=0
    #allocation3 [shape = 'u8[32768]{0}', space=vmem, size = 0x8000, scoped, tag = 'input window, operand 0']
    #allocation4 [shape = 's32[2]{0}', space=sflag, size = 0x8, scoped, tag = 'scoped memory for tpu_custom_call.1']
    #allocation5 [shape = 's32[2]{0}', space=sflag, size = 0x8, scoped, tag = 'scoped memory for tpu_custom_call.1']
    #allocation6 [shape = 'u8[8192]{0}', space=vmem, size = 0x2000, scoped, tag = 'input window, operand 1, single buffered']
    #allocation7 [shape = 's32[1]{0}', space=sflag, size = 0x4, scoped, tag = 'scoped memory for tpu_custom_call.1']
    #allocation8 [shape = 'u8[262144]{0}', space=vmem, size = 0x40000, scoped, tag = 'input window, operand 3, single buffered']
    #allocation9 [shape = 'u8[4096]{0}', space=vmem, size = 0x1000, scoped, tag = 'output window, operand 0, single buffered']
    %10 = vsyncpa [#allocation4], 0
    %s11 = scalar_lea.sflag [#allocation4], 1
    %12 = vsyncpa %s11, 0
    %13 = vsyncpa [#allocation7], 0
    %14 = vsyncpa [#allocation5], 0
    loop: start=0, step=1, limit=4
    $region2: #{tpu_custom_call.1} parent=1 // loop_pre_header
      _
    $region3: #{tpu_custom_call.1} parent=1 // loop_header
      %s16 = sphi 0, %s20
      %p17 = scmp.ge.s32.totalorder %s16, 4
      %s23 = sphi 0, %s35
      %s24 = sphi 0, %s31
      %s25 = sphi 0, %s23
      %s26 = sphi 0, %s24
      %s27 = sphi 0, %s25
      %s28 = sphi 0, %s26
      %s40 = sphi 0, %s42
      %s43 = sphi 0, %s40
      %s44 = sphi 0, %s43
      %s60 = sphi 0, %s44
      %s64 = sphi 0, %s64
      %s66 = sphi 0, %s64
      %s67 = sphi 0, %s66
      %s81 = sphi 0, %s67
      %s85 = sphi 0, %s85
      %s87 = sphi 0, %s85
      %s88 = sphi 0, %s87
      %s102 = sphi 0, %s88
      %s106 = sphi 0, %s106
      %s108 = sphi 0, %s106
      %s109 = sphi 0, %s108
      %s123 = sphi 0, %s109
      %s127 = sphi 0, %s127
      %s129 = sphi 0, %s127
      %s130 = sphi 0, %s129
      %s144 = sphi 0, %s130
      %s150 = sphi 0, %s152
      %s153 = sphi 0, %s150
      %s154 = sphi 0, %s153
      %s170 = sphi 0, %s154
    $region4: #{tpu_custom_call.1} parent=1 // loop_header_branch
      %19 = sbr.rel (%p17) target = $region8
    $region5: #{tpu_custom_call.1} parent=1 // loop_body
      %s21 = ssub.s32 %s16, 1
      %s22 = ssub.s32 %s16, 2
      %s29 = sadd.s32 1, %s24
      %p30 = scmp.ge.s32.totalorder %s29, 2
      %s31 = scalar_select %p30, 0, %s29
      %s32 = sadd.s32 1, %s23
      %s33 = scalar_select %p30, %s32, %s23
      %p34 = scmp.ge.s32.totalorder %s33, 1
      %s35 = scalar_select %p34, 0, %s33
      %s36 = ssub.s32 %s23, %s35
      %s37 = ssub.s32 %s24, %s31
      %s38 = sor.u32 %s36, %s37
      %p39 = scmp.eq.s32.totalorder %s38, 0
      %s41 = sadd.s32 %s40, 1
      %s42 = scalar_select %p39, %s40, %s41
      %p45 = pneg %p39
      %p46 = scmp.eq.s32.totalorder %s16, 1
      %p47 = por %p45, %p46
      %p48 = scmp.ne.s32.totalorder %s40, %s43
      %p49 = scmp.eq.s32.totalorder %s16, 0
      %p50 = por %p48, %p49
      %p51 = scmp.ne.s32.totalorder %s40, %s43
      %p52 = scmp.eq.s32.totalorder %s21, 1
      %p53 = por %p51, %p52
      %p54 = scmp.ne.s32.totalorder %s43, %s44
      %p55 = scmp.eq.s32.totalorder %s21, 0
      %p56 = por %p54, %p55
      %p57 = scmp.ne.s32.totalorder %s43, %s44
      %p58 = scmp.eq.s32.totalorder %s22, 1
      %p59 = por %p57, %p58
      %p61 = scmp.ne.s32.totalorder %s44, %s60
      %p62 = scmp.eq.s32.totalorder %s22, 0
      %p63 = por %p61, %p62
      %s65 = sadd.s32 %s64, 1
      %p68 = scmp.eq.s32.totalorder %s16, 1
      %p69 = scmp.ne.s32.totalorder %s64, %s66
      %p70 = scmp.eq.s32.totalorder %s16, 0
      %p71 = por %p69, %p70
      %p72 = scmp.ne.s32.totalorder %s64, %s66
      %p73 = scmp.eq.s32.totalorder %s21, 1
      %p74 = por %p72, %p73
      %p75 = scmp.ne.s32.totalorder %s66, %s67
      %p76 = scmp.eq.s32.totalorder %s21, 0
      %p77 = por %p75, %p76
      %p78 = scmp.ne.s32.totalorder %s66, %s67
      %p79 = scmp.eq.s32.totalorder %s22, 1
      %p80 = por %p78, %p79
      %p82 = scmp.ne.s32.totalorder %s67, %s81
      %p83 = scmp.eq.s32.totalorder %s22, 0
      %p84 = por %p82, %p83
      %s86 = sadd.s32 %s85, 1
      %p89 = scmp.eq.s32.totalorder %s16, 1
      %p90 = scmp.ne.s32.totalorder %s85, %s87
      %p91 = scmp.eq.s32.totalorder %s16, 0
      %p92 = por %p90, %p91
      %p93 = scmp.ne.s32.totalorder %s85, %s87
      %p94 = scmp.eq.s32.totalorder %s21, 1
      %p95 = por %p93, %p94
      %p96 = scmp.ne.s32.totalorder %s87, %s88
      %p97 = scmp.eq.s32.totalorder %s21, 0
      %p98 = por %p96, %p97
      %p99 = scmp.ne.s32.totalorder %s87, %s88
      %p100 = scmp.eq.s32.totalorder %s22, 1
      %p101 = por %p99, %p100
      %p103 = scmp.ne.s32.totalorder %s88, %s102
      %p104 = scmp.eq.s32.totalorder %s22, 0
      %p105 = por %p103, %p104
      %s107 = sadd.s32 %s106, 1
      %p110 = scmp.eq.s32.totalorder %s16, 1
      %p111 = scmp.ne.s32.totalorder %s106, %s108
      %p112 = scmp.eq.s32.totalorder %s16, 0
      %p113 = por %p111, %p112
      %p114 = scmp.ne.s32.totalorder %s106, %s108
      %p115 = scmp.eq.s32.totalorder %s21, 1
      %p116 = por %p114, %p115
      %p117 = scmp.ne.s32.totalorder %s108, %s109
      %p118 = scmp.eq.s32.totalorder %s21, 0
      %p119 = por %p117, %p118
      %p120 = scmp.ne.s32.totalorder %s108, %s109
      %p121 = scmp.eq.s32.totalorder %s22, 1
      %p122 = por %p120, %p121
      %p124 = scmp.ne.s32.totalorder %s109, %s123
      %p125 = scmp.eq.s32.totalorder %s22, 0
      %p126 = por %p124, %p125
      %s128 = sadd.s32 %s127, 1
      %p131 = scmp.eq.s32.totalorder %s16, 1
      %p132 = scmp.ne.s32.totalorder %s127, %s129
      %p133 = scmp.eq.s32.totalorder %s16, 0
      %p134 = por %p132, %p133
      %p135 = scmp.ne.s32.totalorder %s127, %s129
      %p136 = scmp.eq.s32.totalorder %s21, 1
      %p137 = por %p135, %p136
      %p138 = scmp.ne.s32.totalorder %s129, %s130
      %p139 = scmp.eq.s32.totalorder %s21, 0
      %p140 = por %p138, %p139
      %p141 = scmp.ne.s32.totalorder %s129, %s130
      %p142 = scmp.eq.s32.totalorder %s22, 1
      %p143 = por %p141, %p142
      %p145 = scmp.ne.s32.totalorder %s130, %s144
      %p146 = scmp.eq.s32.totalorder %s22, 0
      %p147 = por %p145, %p146
      %s148 = ssub.s32 %s23, %s35
      %p149 = scmp.eq.s32.totalorder %s148, 0
      %s151 = sadd.s32 %s150, 1
      %s152 = scalar_select %p149, %s150, %s151
      %p155 = pneg %p149
      %p156 = scmp.eq.s32.totalorder %s16, 1
      %p157 = por %p155, %p156
      %p158 = scmp.ne.s32.totalorder %s150, %s153
      %p159 = scmp.eq.s32.totalorder %s16, 0
      %p160 = por %p158, %p159
      %p161 = scmp.ne.s32.totalorder %s150, %s153
      %p162 = scmp.eq.s32.totalorder %s21, 1
      %p163 = por %p161, %p162
      %p164 = scmp.ne.s32.totalorder %s153, %s154
      %p165 = scmp.eq.s32.totalorder %s21, 0
      %p166 = por %p164, %p165
      %p167 = scmp.ne.s32.totalorder %s153, %s154
      %p168 = scmp.eq.s32.totalorder %s22, 1
      %p169 = por %p167, %p168
      %p171 = scmp.ne.s32.totalorder %s154, %s170
      %p172 = scmp.eq.s32.totalorder %s22, 0
      %p173 = por %p171, %p172
      %p174 = scmp.le.s32.totalorder 1, %s16
      %p175 = scmp.lt.s32.totalorder %s16, 3
      %p176 = pnand %p174, %p175
      %p177 = pneg %p176
      // Predicated region
      $region9: #{tpu_custom_call.1} parent=5 // pred_check
        _
      $region10: #{tpu_custom_call.1} parent=5 // pred_check_branch
        %179 = sbr.rel (%p176) target = $region12
      $region11: #{tpu_custom_call.1} parent=5 // pred_region
        %s180 = ssub.s32 %s16, 1
        // Predicated region
        $region13: #{tpu_custom_call.1} parent=11 // pred_check
          %p181 = pneg %p77
        $region14: #{tpu_custom_call.1} parent=11 // pred_check_branch
          %183 = sbr.rel (%p181) target = $region16
        $region15: #{tpu_custom_call.1} parent=11 // pred_region
          %s185 = ssub.s32 256, 256
          %186 = vsyncadd [#allocation7], %s185
          %s188 = sshll.u32 [#allocation6], 4
          %s189 = int_to_ptr.vmem [resolvable:$true] %s188
          %191 = dma.hbm_to_vmem [thread:$0]  %s1, 256, %s189, [#allocation7]
        $region16: #{tpu_custom_call.1} parent=11 // pred_fallthru
          _
        // Predicated region
        $region17: #{tpu_custom_call.1} parent=11 // pred_check
          %p192 = pneg %p98
        $region18: #{tpu_custom_call.1} parent=11 // pred_check_branch
          %194 = sbr.rel (%p192) target = $region20
        $region19: #{tpu_custom_call.1} parent=11 // pred_region
          _
        $region20: #{tpu_custom_call.1} parent=11 // pred_fallthru
          _
        // Predicated region
        $region21: #{tpu_custom_call.1} parent=11 // pred_check
          %p195 = pneg %p119
        $region22: #{tpu_custom_call.1} parent=11 // pred_check_branch
          %197 = sbr.rel (%p195) target = $region24
        $region23: #{tpu_custom_call.1} parent=11 // pred_region
          %s199 = ssub.s32 8192, 8192
          %200 = vsyncadd [#allocation7], %s199
          %s201 = sshll.u32 [#allocation8], 4
          %s202 = int_to_ptr.vmem [resolvable:$true] %s201
          %207 = dma.hbm_to_vmem [thread:$0]  %s3, 8192, %s202, [#allocation7], 128, 128, 8
        $region24: #{tpu_custom_call.1} parent=11 // pred_fallthru
          _
        // Predicated region
        $region25: #{tpu_custom_call.1} parent=11 // pred_check
          %p208 = pneg %p140
        $region26: #{tpu_custom_call.1} parent=11 // pred_check_branch
          %210 = sbr.rel (%p208) target = $region28
        $region27: #{tpu_custom_call.1} parent=11 // pred_region
          _
        $region28: #{tpu_custom_call.1} parent=11 // pred_fallthru
          _
      $region12: #{tpu_custom_call.1} parent=5 // pred_fallthru
        _
      %p211 = scmp.lt.s32.totalorder %s16, 2
      // Predicated region
      $region29: #{tpu_custom_call.1} parent=5 // pred_check
        %p212 = pneg %p211
      $region30: #{tpu_custom_call.1} parent=5 // pred_check_branch
        %214 = sbr.rel (%p212) target = $region32
      $region31: #{tpu_custom_call.1} parent=5 // pred_region
        // Predicated region
        $region33: #{tpu_custom_call.1} parent=31 // pred_check
          %p215 = pneg %p50
        $region34: #{tpu_custom_call.1} parent=31 // pred_check_branch
          %217 = sbr.rel (%p215) target = $region36
        $region35: #{tpu_custom_call.1} parent=31 // pred_region
          %s218 = sand.u32 %s40, 1
          %s219 = scalar_lea.sflag [#allocation4], %s218
          %s220 = sand.u32 %s40, 1
          %s221 = smul.addr %s220, 32
          %s222 = scalar_lea.vmem [#allocation3], %s221
          %s223 = smul.u32 8, %s23
          %s225 = ssub.s32 512, 512
          %226 = vsyncadd %s219, %s225
          %s227 = smul.addr %s223, 2
          %s228 = sadd.s32 %s24, %s227
          %s229 = smul.addr %s228, 64
          %s230 = scalar_lea.hbm %s0, %s229
          %s231 = sshll.u32 %s222, 4
          %s232 = int_to_ptr.vmem [resolvable:$true] %s231
          %237 = dma.hbm_to_vmem [thread:$0]  %s230, 512, %s232, %s219, 128, 64, 4
        $region36: #{tpu_custom_call.1} parent=31 // pred_fallthru
          _
      $region32: #{tpu_custom_call.1} parent=5 // pred_fallthru
        _
      %p238 = scmp.le.s32.totalorder 1, %s16
      %p239 = scmp.lt.s32.totalorder %s16, 3
      %p240 = pnand %p238, %p239
      %p241 = pneg %p240
      // Predicated region
      $region37: #{tpu_custom_call.1} parent=5 // pred_check
        _
      $region38: #{tpu_custom_call.1} parent=5 // pred_check_branch
        %243 = sbr.rel (%p240) target = $region40
      $region39: #{tpu_custom_call.1} parent=5 // pred_region
        %s244 = ssub.s32 %s16, 1
        %s245 = sand.u32 %s43, 1
        %s246 = scalar_lea.sflag [#allocation4], %s245
        %s247 = sand.u32 %s43, 1
        %s248 = smul.addr %s247, 32
        %s249 = scalar_lea.vmem [#allocation3], %s248
        // Predicated region
        $region41: #{tpu_custom_call.1} parent=39 // pred_check
          %p250 = pneg %p56
        $region42: #{tpu_custom_call.1} parent=39 // pred_check_branch
          %252 = sbr.rel (%p250) target = $region44
        $region43: #{tpu_custom_call.1} parent=39 // pred_region
          %253 = dma.done %s246, 512
        $region44: #{tpu_custom_call.1} parent=39 // pred_fallthru
          _
        // Predicated region
        $region45: #{tpu_custom_call.1} parent=39 // pred_check
          %p254 = pneg %p77
        $region46: #{tpu_custom_call.1} parent=39 // pred_check_branch
          %256 = sbr.rel (%p254) target = $region48
        $region47: #{tpu_custom_call.1} parent=39 // pred_region
          %257 = dma.done [#allocation7], 256
        $region48: #{tpu_custom_call.1} parent=39 // pred_fallthru
          _
        // Predicated region
        $region49: #{tpu_custom_call.1} parent=39 // pred_check
          %p258 = pneg %p119
        $region50: #{tpu_custom_call.1} parent=39 // pred_check_branch
          %260 = sbr.rel (%p258) target = $region52
        $region51: #{tpu_custom_call.1} parent=39 // pred_region
          %261 = dma.done [#allocation7], 8192
        $region52: #{tpu_custom_call.1} parent=39 // pred_fallthru
          _
        %s262 = sand.u32 %s43, 1
        %s263 = scalar_lea.sflag [#allocation4], %s262
        %s264 = sand.u32 %s43, 1
        %s265 = smul.addr %s264, 32
        %s266 = scalar_lea.vmem [#allocation3], %s265
        %p267 = pneg %p56
        %p268 = pneg %p53
        %p269 = pneg %p77
        %p270 = pneg %p74
        %p271 = pneg %p98
        %p272 = pneg %p95
        %p273 = pneg %p119
        %p274 = pneg %p116
        %p275 = pneg %p140
        %p276 = pneg %p137
        %p277 = pneg %p166
        %p278 = pneg %p163
        %s279 = smul.u32 8, %s25
        %p280 = scmp.eq.s32.totalorder %s26, 0
        // Predicated region
        $region53: #{tpu_custom_call.1} parent=39 // pred_check
          %p281 = pneg %p280
        $region54: #{tpu_custom_call.1} parent=39 // pred_check_branch
          %283 = sbr.rel (%p281) target = $region56
        $region55: #{tpu_custom_call.1} parent=39 // pred_region
          %vm284 = vcmask 31744
          %285 = vst.msk [vmem:[#allocation2] sm:$0xff] %vm284, 0.0
        $region56: #{tpu_custom_call.1} parent=39 // pred_fallthru
          _
        %v286 = vld [vmem:[#allocation2] sm:$0xff]
        %v287 = vld [vmem:[%s249] sm:$0xf]
        %v288 = vld [vmem:[%s249 + $0x4] sm:$0xf]
        %v289 = vld [vmem:[%s249 + $0x8] sm:$0xf]
        %v290 = vld [vmem:[%s249 + $0xc] sm:$0xf]
        %v291 = vld [vmem:[%s249 + $0x10] sm:$0xf]
        %v292 = vld [vmem:[%s249 + $0x14] sm:$0xf]
        %v293 = vld [vmem:[%s249 + $0x18] sm:$0xf]
        %v294 = vld [vmem:[%s249 + $0x1c] sm:$0xf]
        %vm295 = vcmask 1043456
        %v296 = vsel %vm295, %v287, 0.0
        %297 = vadd.xlane.f32.xlu0 %v296
        %v298 = vpop.xlane.xlu0 %297
        %v299 = vsel %vm295, %v288, 0.0
        %300 = vadd.xlane.f32.xlu0 %v299
        %v301 = vpop.xlane.xlu0 %300
        %v302 = vsel %vm295, %v289, 0.0
        %303 = vadd.xlane.f32.xlu0 %v302
        %v304 = vpop.xlane.xlu0 %303
        %v305 = vsel %vm295, %v290, 0.0
        %306 = vadd.xlane.f32.xlu0 %v305
        %v307 = vpop.xlane.xlu0 %306
        %v308 = vsel %vm295, %v291, 0.0
        %309 = vadd.xlane.f32.xlu0 %v308
        %v310 = vpop.xlane.xlu0 %309
        %v311 = vsel %vm295, %v292, 0.0
        %312 = vadd.xlane.f32.xlu0 %v311
        %v313 = vpop.xlane.xlu0 %312
        %v314 = vsel %vm295, %v293, 0.0
        %315 = vadd.xlane.f32.xlu0 %v314
        %v316 = vpop.xlane.xlu0 %315
        %v317 = vsel %vm295, %v294, 0.0
        %318 = vadd.xlane.f32.xlu0 %v317
        %v319 = vpop.xlane.xlu0 %318
        %v328 = vlaneseq
        %v329 = vand.u32 %v328, 127
        %v330 = vlaneseq
        %v331 = vshrl.u32 %v330, 7
        %v332 = vsub.s32 %v329, %v331
        %v333 = vrot.slane %v298, %v332
        %v334 = vlaneseq
        %v335 = vshrl.u32 %v334, 7
        %v336 = vsub.s32 %v329, %v335
        %v337 = vrot.slane %v301, %v336
        %v338 = vlaneseq
        %v339 = vshrl.u32 %v338, 7
        %v340 = vsub.s32 %v329, %v339
        %v341 = vrot.slane %v304, %v340
        %v342 = vlaneseq
        %v343 = vshrl.u32 %v342, 7
        %v344 = vsub.s32 %v329, %v343
        %v345 = vrot.slane %v307, %v344
        %v346 = vlaneseq
        %v347 = vshrl.u32 %v346, 7
        %v348 = vsub.s32 %v329, %v347
        %v349 = vrot.slane %v310, %v348
        %v350 = vlaneseq
        %v351 = vshrl.u32 %v350, 7
        %v352 = vsub.s32 %v329, %v351
        %v353 = vrot.slane %v313, %v352
        %v354 = vlaneseq
        %v355 = vshrl.u32 %v354, 7
        %v356 = vsub.s32 %v329, %v355
        %v357 = vrot.slane %v316, %v356
        %v358 = vlaneseq
        %v359 = vshrl.u32 %v358, 7
        %v360 = vsub.s32 %v329, %v359
        %v361 = vrot.slane %v319, %v360
        %vm362 = vcmask 1041409
        %v363 = vsel %vm362, %v337, %v333
        %vm364 = vcmask 1042434
        %v365 = vsel %vm364, %v341, %v363
        %vm366 = vcmask 1043459
        %v367 = vsel %vm366, %v345, %v365
        %vm368 = vcmask 1044484
        %v369 = vsel %vm368, %v349, %v367
        %vm370 = vcmask 1045509
        %v371 = vsel %vm370, %v353, %v369
        %vm372 = vcmask 1046534
        %v373 = vsel %vm372, %v357, %v371
        %vm374 = vcmask 1047559
        %v375 = vsel %vm374, %v361, %v373
        %v377 = vadd.f32 %v286, %v375
        %vm378 = vcmask 31744
        %379 = vst.msk [vmem:[#allocation2] sm:$0xff] %vm378, %v377
        %p380 = scmp.eq.s32.totalorder %s26, 1
        // Predicated region
        $region57: #{tpu_custom_call.1} parent=39 // pred_check
          %p381 = pneg %p380
        $region58: #{tpu_custom_call.1} parent=39 // pred_check_branch
          %383 = sbr.rel (%p381) target = $region60
        $region59: #{tpu_custom_call.1} parent=39 // pred_region
          %v384 = vld [vmem:[#allocation2] sm:$0xff]
          %v385 = vld [vmem:[#allocation6] sm:$0xff]
          %v386 = vld [vmem:[#allocation6 + $0x8] sm:$0xff]
          %v387 = vld [vmem:[%s2] sm:$0xf]
          %v389 = vlaneseq
          %v390 = vshrl.u32 %v389, 7
          %v391 = vsub.s32 0, %v390
          %v392 = vrot.slane %v387, %v391
          %v393 = vlaneseq
          %v394 = vshrl.u32 %v393, 7
          %v395 = vsub.s32 1, %v394
          %v396 = vrot.slane %v387, %v395
          %v397 = vlaneseq
          %v398 = vshrl.u32 %v397, 7
          %v399 = vsub.s32 2, %v398
          %v400 = vrot.slane %v387, %v399
          %v401 = vlaneseq
          %v402 = vshrl.u32 %v401, 7
          %v403 = vsub.s32 3, %v402
          %v404 = vrot.slane %v387, %v403
          %v411 = vcombine.high %v385, %v385
          %v412 = vcombine.high %v386, %v386
          %v414 = vsel %vm378, %v384, 0
          %v416 = vsel %vm295, %v385, 0
          %v418 = vsel %vm295, %v411, 0
          %v420 = vsel %vm295, %v386, 0
          %v422 = vsel %vm295, %v412, 0
          %424 = vmatprep.subr.mxu0 %v418
          %425 = vmatpush1.msra.mxu0 %v416
          %426 = vmatprep.subr.mxu0 0.0
          %427 = vmatpush1.msra.mxu0 0.0
          %428 = vmatprep.subr.mxu0 0.0
          %429 = vmatpush1.msra.mxu0 0.0
          %430 = vmatprep.subr.mxu0 0.0
          %431 = vmatpush1.msra.mxu0 0.0
          %432 = vmatprep.subr.mxu0 0.0
          %433 = vmatpush1.msra.mxu0 0.0
          %434 = vmatprep.subr.mxu0 0.0
          %435 = vmatpush1.msra.mxu0 0.0
          %436 = vmatprep.subr.mxu0 0.0
          %437 = vmatpush1.msra.mxu0 0.0
          %438 = vmatprep.subr.mxu0 0.0
          %439 = vmatpush1.msra.mxu0 0.0
          %440 = vmatprep.subr.mxu0 0.0
          %441 = vmatpush1.msra.mxu0 0.0
          %442 = vmatprep.subr.mxu0 0.0
          %443 = vmatpush1.msra.mxu0 0.0
          %444 = vmatprep.subr.mxu0 0.0
          %445 = vmatpush1.msra.mxu0 0.0
          %446 = vmatprep.subr.mxu0 0.0
          %447 = vmatpush1.msra.mxu0 0.0
          %448 = vmatprep.subr.mxu0 0.0
          %449 = vmatpush1.msra.mxu0 0.0
          %450 = vmatprep.subr.mxu0 0.0
          %451 = vmatpush1.msra.mxu0 0.0
          %452 = vmatprep.subr.mxu0 0.0
          %453 = vmatpush1.msra.mxu0 0.0
          %454 = vmatprep.subr.mxu0 0.0
          %455 = vmatpush1.msra.mxu0 0.0
          %456 = vmatprep.subr.mxu0 0.0
          %457 = vmatpush1.msra.mxu0 0.0
          %458 = vmatprep.subr.mxu0 0.0
          %459 = vmatpush1.msra.mxu0 0.0
          %460 = vmatprep.subr.mxu0 0.0
          %461 = vmatpush1.msra.mxu0 0.0
          %462 = vmatprep.subr.mxu0 0.0
          %463 = vmatpush1.msra.mxu0 0.0
          %464 = vmatprep.subr.mxu0 0.0
          %465 = vmatpush1.msra.mxu0 0.0
          %466 = vmatprep.subr.mxu0 0.0
          %467 = vmatpush1.msra.mxu0 0.0
          %468 = vmatprep.subr.mxu0 0.0
          %469 = vmatpush1.msra.mxu0 0.0
          %470 = vmatprep.subr.mxu0 0.0
          %471 = vmatpush1.msra.mxu0 0.0
          %472 = vmatprep.subr.mxu0 0.0
          %473 = vmatpush1.msra.mxu0 0.0
          %474 = vmatprep.subr.mxu0 0.0
          %475 = vmatpush1.msra.mxu0 0.0
          %476 = vmatprep.subr.mxu0 0.0
          %477 = vmatpush1.msra.mxu0 0.0
          %478 = vmatprep.subr.mxu0 0.0
          %479 = vmatpush1.msra.mxu0 0.0
          %480 = vmatprep.subr.mxu0 0.0
          %481 = vmatpush1.msra.mxu0 0.0
          %482 = vmatprep.subr.mxu0 0.0
          %483 = vmatpush1.msra.mxu0 0.0
          %484 = vmatprep.subr.mxu0 0.0
          %485 = vmatpush1.msra.mxu0 0.0
          %486 = vmatprep.subr.mxu0 0.0
          %487 = vmatpush1.msra.mxu0 0.0
          %488 = vmatprep.mubr.f32.mxu0 0.0
          %489 = vmatmul.mubr.f32.gmra.mrb[0].mxu0 %v414
          %v490 = vpop.f32.mrb[0].mxu0
          %v491 = vadd.f32 %v392, %v490
          %v492 = vpop.f32.mrb[0].mxu0
          %v493 = vadd.f32 %v396, %v492
          %494 = vdwg.mxu0
          %495 = vmatprep.subr.mxu0 %v422
          %496 = vmatpush1.msra.mxu0 %v420
          %497 = vmatprep.subr.mxu0 0.0
          %498 = vmatpush1.msra.mxu0 0.0
          %499 = vmatprep.subr.mxu0 0.0
          %500 = vmatpush1.msra.mxu0 0.0
          %501 = vmatprep.subr.mxu0 0.0
          %502 = vmatpush1.msra.mxu0 0.0
          %503 = vmatprep.subr.mxu0 0.0
          %504 = vmatpush1.msra.mxu0 0.0
          %505 = vmatprep.subr.mxu0 0.0
          %506 = vmatpush1.msra.mxu0 0.0
          %507 = vmatprep.subr.mxu0 0.0
          %508 = vmatpush1.msra.mxu0 0.0
          %509 = vmatprep.subr.mxu0 0.0
          %510 = vmatpush1.msra.mxu0 0.0
          %511 = vmatprep.subr.mxu0 0.0
          %512 = vmatpush1.msra.mxu0 0.0
          %513 = vmatprep.subr.mxu0 0.0
          %514 = vmatpush1.msra.mxu0 0.0
          %515 = vmatprep.subr.mxu0 0.0
          %516 = vmatpush1.msra.mxu0 0.0
          %517 = vmatprep.subr.mxu0 0.0
          %518 = vmatpush1.msra.mxu0 0.0
          %519 = vmatprep.subr.mxu0 0.0
          %520 = vmatpush1.msra.mxu0 0.0
          %521 = vmatprep.subr.mxu0 0.0
          %522 = vmatpush1.msra.mxu0 0.0
          %523 = vmatprep.subr.mxu0 0.0
          %524 = vmatpush1.msra.mxu0 0.0
          %525 = vmatprep.subr.mxu0 0.0
          %526 = vmatpush1.msra.mxu0 0.0
          %527 = vmatprep.subr.mxu0 0.0
          %528 = vmatpush1.msra.mxu0 0.0
          %529 = vmatprep.subr.mxu0 0.0
          %530 = vmatpush1.msra.mxu0 0.0
          %531 = vmatprep.subr.mxu0 0.0
          %532 = vmatpush1.msra.mxu0 0.0
          %533 = vmatprep.subr.mxu0 0.0
          %534 = vmatpush1.msra.mxu0 0.0
          %535 = vmatprep.subr.mxu0 0.0
          %536 = vmatpush1.msra.mxu0 0.0
          %537 = vmatprep.subr.mxu0 0.0
          %538 = vmatpush1.msra.mxu0 0.0
          %539 = vmatprep.subr.mxu0 0.0
          %540 = vmatpush1.msra.mxu0 0.0
          %541 = vmatprep.subr.mxu0 0.0
          %542 = vmatpush1.msra.mxu0 0.0
          %543 = vmatprep.subr.mxu0 0.0
          %544 = vmatpush1.msra.mxu0 0.0
          %545 = vmatprep.subr.mxu0 0.0
          %546 = vmatpush1.msra.mxu0 0.0
          %547 = vmatprep.subr.mxu0 0.0
          %548 = vmatpush1.msra.mxu0 0.0
          %549 = vmatprep.subr.mxu0 0.0
          %550 = vmatpush1.msra.mxu0 0.0
          %551 = vmatprep.subr.mxu0 0.0
          %552 = vmatpush1.msra.mxu0 0.0
          %553 = vmatprep.subr.mxu0 0.0
          %554 = vmatpush1.msra.mxu0 0.0
          %555 = vmatprep.subr.mxu0 0.0
          %556 = vmatpush1.msra.mxu0 0.0
          %557 = vmatprep.subr.mxu0 0.0
          %558 = vmatpush1.msra.mxu0 0.0
          %559 = vmatprep.mubr.f32.mxu0 0.0
          %560 = vmatmul.mubr.f32.gmra.mrb[0].mxu0 %v414
          %v561 = vpop.f32.mrb[0].mxu0
          %v562 = vadd.f32 %v400, %v561
          %v563 = vpop.f32.mrb[0].mxu0
          %v564 = vadd.f32 %v404, %v563
          %565 = vdwg.mxu0
          %v566 = vld [vmem:[#allocation8] sm:$0xff]
          %v567 = vld [vmem:[#allocation8 + $0x8] sm:$0xff]
          %v568 = vld [vmem:[#allocation8 + $0x10] sm:$0xff]
          %v569 = vld [vmem:[#allocation8 + $0x18] sm:$0xff]
          %v570 = vld [vmem:[#allocation8 + $0x20] sm:$0xff]
          %v571 = vld [vmem:[#allocation8 + $0x28] sm:$0xff]
          %v572 = vld [vmem:[#allocation8 + $0x30] sm:$0xff]
          %v573 = vld [vmem:[#allocation8 + $0x38] sm:$0xff]
          %v574 = vld [vmem:[#allocation8 + $0x40] sm:$0xff]
          %v575 = vld [vmem:[#allocation8 + $0x48] sm:$0xff]
          %v576 = vld [vmem:[#allocation8 + $0x50] sm:$0xff]
          %v577 = vld [vmem:[#allocation8 + $0x58] sm:$0xff]
          %v578 = vld [vmem:[#allocation8 + $0x60] sm:$0xff]
          %v579 = vld [vmem:[#allocation8 + $0x68] sm:$0xff]
          %v580 = vld [vmem:[#allocation8 + $0x70] sm:$0xff]
          %v581 = vld [vmem:[#allocation8 + $0x78] sm:$0xff]
          %v582 = vld [vmem:[#allocation8 + $0x80] sm:$0xff]
          %v583 = vld [vmem:[#allocation8 + $0x88] sm:$0xff]
          %v584 = vld [vmem:[#allocation8 + $0x90] sm:$0xff]
          %v585 = vld [vmem:[#allocation8 + $0x98] sm:$0xff]
          %v586 = vld [vmem:[#allocation8 + $0xa0] sm:$0xff]
          %v587 = vld [vmem:[#allocation8 + $0xa8] sm:$0xff]
          %v588 = vld [vmem:[#allocation8 + $0xb0] sm:$0xff]
          %v589 = vld [vmem:[#allocation8 + $0xb8] sm:$0xff]
          %v590 = vld [vmem:[#allocation8 + $0xc0] sm:$0xff]
          %v591 = vld [vmem:[#allocation8 + $0xc8] sm:$0xff]
          %v592 = vld [vmem:[#allocation8 + $0xd0] sm:$0xff]
          %v593 = vld [vmem:[#allocation8 + $0xd8] sm:$0xff]
          %v594 = vld [vmem:[#allocation8 + $0xe0] sm:$0xff]
          %v595 = vld [vmem:[#allocation8 + $0xe8] sm:$0xff]
          %v596 = vld [vmem:[#allocation8 + $0xf0] sm:$0xff]
          %v597 = vld [vmem:[#allocation8 + $0xf8] sm:$0xff]
          %v598 = vld [vmem:[#allocation8 + $0x100] sm:$0xff]
          %v599 = vld [vmem:[#allocation8 + $0x108] sm:$0xff]
          %v600 = vld [vmem:[#allocation8 + $0x110] sm:$0xff]
          %v601 = vld [vmem:[#allocation8 + $0x118] sm:$0xff]
          %v602 = vld [vmem:[#allocation8 + $0x120] sm:$0xff]
          %v603 = vld [vmem:[#allocation8 + $0x128] sm:$0xff]
          %v604 = vld [vmem:[#allocation8 + $0x130] sm:$0xff]
          %v605 = vld [vmem:[#allocation8 + $0x138] sm:$0xff]
          %v606 = vld [vmem:[#allocation8 + $0x140] sm:$0xff]
          %v607 = vld [vmem:[#allocation8 + $0x148] sm:$0xff]
          %v608 = vld [vmem:[#allocation8 + $0x150] sm:$0xff]
          %v609 = vld [vmem:[#allocation8 + $0x158] sm:$0xff]
          %v610 = vld [vmem:[#allocation8 + $0x160] sm:$0xff]
          %v611 = vld [vmem:[#allocation8 + $0x168] sm:$0xff]
          %v612 = vld [vmem:[#allocation8 + $0x170] sm:$0xff]
          %v613 = vld [vmem:[#allocation8 + $0x178] sm:$0xff]
          %v614 = vld [vmem:[#allocation8 + $0x180] sm:$0xff]
          %v615 = vld [vmem:[#allocation8 + $0x188] sm:$0xff]
          %v616 = vld [vmem:[#allocation8 + $0x190] sm:$0xff]
          %v617 = vld [vmem:[#allocation8 + $0x198] sm:$0xff]
          %v618 = vld [vmem:[#allocation8 + $0x1a0] sm:$0xff]
          %v619 = vld [vmem:[#allocation8 + $0x1a8] sm:$0xff]
          %v620 = vld [vmem:[#allocation8 + $0x1b0] sm:$0xff]
          %v621 = vld [vmem:[#allocation8 + $0x1b8] sm:$0xff]
          %v622 = vld [vmem:[#allocation8 + $0x1c0] sm:$0xff]
          %v623 = vld [vmem:[#allocation8 + $0x1c8] sm:$0xff]
          %v624 = vld [vmem:[#allocation8 + $0x1d0] sm:$0xff]
          %v625 = vld [vmem:[#allocation8 + $0x1d8] sm:$0xff]
          %v626 = vld [vmem:[#allocation8 + $0x1e0] sm:$0xff]
          %v627 = vld [vmem:[#allocation8 + $0x1e8] sm:$0xff]
          %v628 = vld [vmem:[#allocation8 + $0x1f0] sm:$0xff]
          %v629 = vld [vmem:[#allocation8 + $0x1f8] sm:$0xff]
          %v630 = vld [vmem:[%s4] sm:$0x1]
          %v632 = vlaneseq
          %v633 = vshrl.u32 %v632, 7
          %v634 = vsub.s32 0, %v633
          %v635 = vrot.slane %v630, %v634
          %637 = vmatprep.subr.mxu0 0.0
          %638 = vmatpush1.msra.mxu0 %v566
          %639 = vmatprep.subr.mxu0 0.0
          %640 = vmatpush1.msra.mxu0 %v567
          %641 = vmatprep.subr.mxu0 0.0
          %642 = vmatpush1.msra.mxu0 %v568
          %643 = vmatprep.subr.mxu0 0.0
          %644 = vmatpush1.msra.mxu0 %v569
          %645 = vmatprep.subr.mxu0 0.0
          %646 = vmatpush1.msra.mxu0 %v570
          %647 = vmatprep.subr.mxu0 0.0
          %648 = vmatpush1.msra.mxu0 %v571
          %649 = vmatprep.subr.mxu0 0.0
          %650 = vmatpush1.msra.mxu0 %v572
          %651 = vmatprep.subr.mxu0 0.0
          %652 = vmatpush1.msra.mxu0 %v573
          %653 = vmatprep.subr.mxu0 0.0
          %654 = vmatpush1.msra.mxu0 %v574
          %655 = vmatprep.subr.mxu0 0.0
          %656 = vmatpush1.msra.mxu0 %v575
          %657 = vmatprep.subr.mxu0 0.0
          %658 = vmatpush1.msra.mxu0 %v576
          %659 = vmatprep.subr.mxu0 0.0
          %660 = vmatpush1.msra.mxu0 %v577
          %661 = vmatprep.subr.mxu0 0.0
          %662 = vmatpush1.msra.mxu0 %v578
          %663 = vmatprep.subr.mxu0 0.0
          %664 = vmatpush1.msra.mxu0 %v579
          %665 = vmatprep.subr.mxu0 0.0
          %666 = vmatpush1.msra.mxu0 %v580
          %667 = vmatprep.subr.mxu0 0.0
          %668 = vmatpush1.msra.mxu0 %v581
          %669 = vmatprep.subr.mxu0 0.0
          %670 = vmatpush1.msra.mxu0 %v582
          %671 = vmatprep.subr.mxu0 0.0
          %672 = vmatpush1.msra.mxu0 %v583
          %673 = vmatprep.subr.mxu0 0.0
          %674 = vmatpush1.msra.mxu0 %v584
          %675 = vmatprep.subr.mxu0 0.0
          %676 = vmatpush1.msra.mxu0 %v585
          %677 = vmatprep.subr.mxu0 0.0
          %678 = vmatpush1.msra.mxu0 %v586
          %679 = vmatprep.subr.mxu0 0.0
          %680 = vmatpush1.msra.mxu0 %v587
          %681 = vmatprep.subr.mxu0 0.0
          %682 = vmatpush1.msra.mxu0 %v588
          %683 = vmatprep.subr.mxu0 0.0
          %684 = vmatpush1.msra.mxu0 %v589
          %685 = vmatprep.subr.mxu0 0.0
          %686 = vmatpush1.msra.mxu0 %v590
          %687 = vmatprep.subr.mxu0 0.0
          %688 = vmatpush1.msra.mxu0 %v591
          %689 = vmatprep.subr.mxu0 0.0
          %690 = vmatpush1.msra.mxu0 %v592
          %691 = vmatprep.subr.mxu0 0.0
          %692 = vmatpush1.msra.mxu0 %v593
          %693 = vmatprep.subr.mxu0 0.0
          %694 = vmatpush1.msra.mxu0 %v594
          %695 = vmatprep.subr.mxu0 0.0
          %696 = vmatpush1.msra.mxu0 %v595
          %697 = vmatprep.subr.mxu0 0.0
          %698 = vmatpush1.msra.mxu0 %v596
          %699 = vmatprep.subr.mxu0 0.0
          %700 = vmatpush1.msra.mxu0 %v597
          %701 = vmatprep.mubr.f32.mxu0 %v493
          %702 = vmatmul.mubr.f32.gmra.mrb[0].mxu0 %v491
          %v703 = vpop.f32.mrb[0].mxu0
          %v704 = vadd.f32 %v635, %v703
          %v705 = vpop.f32.mrb[0].mxu0
          %706 = vdwg.mxu0
          %707 = vmatprep.subr.mxu0 0.0
          %708 = vmatpush1.msra.mxu0 %v598
          %709 = vmatprep.subr.mxu0 0.0
          %710 = vmatpush1.msra.mxu0 %v599
          %711 = vmatprep.subr.mxu0 0.0
          %712 = vmatpush1.msra.mxu0 %v600
          %713 = vmatprep.subr.mxu0 0.0
          %714 = vmatpush1.msra.mxu0 %v601
          %715 = vmatprep.subr.mxu0 0.0
          %716 = vmatpush1.msra.mxu0 %v602
          %717 = vmatprep.subr.mxu0 0.0
          %718 = vmatpush1.msra.mxu0 %v603
          %719 = vmatprep.subr.mxu0 0.0
          %720 = vmatpush1.msra.mxu0 %v604
          %721 = vmatprep.subr.mxu0 0.0
          %722 = vmatpush1.msra.mxu0 %v605
          %723 = vmatprep.subr.mxu0 0.0
          %724 = vmatpush1.msra.mxu0 %v606
          %725 = vmatprep.subr.mxu0 0.0
          %726 = vmatpush1.msra.mxu0 %v607
          %727 = vmatprep.subr.mxu0 0.0
          %728 = vmatpush1.msra.mxu0 %v608
          %729 = vmatprep.subr.mxu0 0.0
          %730 = vmatpush1.msra.mxu0 %v609
          %731 = vmatprep.subr.mxu0 0.0
          %732 = vmatpush1.msra.mxu0 %v610
          %733 = vmatprep.subr.mxu0 0.0
          %734 = vmatpush1.msra.mxu0 %v611
          %735 = vmatprep.subr.mxu0 0.0
          %736 = vmatpush1.msra.mxu0 %v612
          %737 = vmatprep.subr.mxu0 0.0
          %738 = vmatpush1.msra.mxu0 %v613
          %739 = vmatprep.subr.mxu0 0.0
          %740 = vmatpush1.msra.mxu0 %v614
          %741 = vmatprep.subr.mxu0 0.0
          %742 = vmatpush1.msra.mxu0 %v615
          %743 = vmatprep.subr.mxu0 0.0
          %744 = vmatpush1.msra.mxu0 %v616
          %745 = vmatprep.subr.mxu0 0.0
          %746 = vmatpush1.msra.mxu0 %v617
          %747 = vmatprep.subr.mxu0 0.0
          %748 = vmatpush1.msra.mxu0 %v618
          %749 = vmatprep.subr.mxu0 0.0
          %750 = vmatpush1.msra.mxu0 %v619
          %751 = vmatprep.subr.mxu0 0.0
          %752 = vmatpush1.msra.mxu0 %v620
          %753 = vmatprep.subr.mxu0 0.0
          %754 = vmatpush1.msra.mxu0 %v621
          %755 = vmatprep.subr.mxu0 0.0
          %756 = vmatpush1.msra.mxu0 %v622
          %757 = vmatprep.subr.mxu0 0.0
          %758 = vmatpush1.msra.mxu0 %v623
          %759 = vmatprep.subr.mxu0 0.0
          %760 = vmatpush1.msra.mxu0 %v624
          %761 = vmatprep.subr.mxu0 0.0
          %762 = vmatpush1.msra.mxu0 %v625
          %763 = vmatprep.subr.mxu0 0.0
          %764 = vmatpush1.msra.mxu0 %v626
          %765 = vmatprep.subr.mxu0 0.0
          %766 = vmatpush1.msra.mxu0 %v627
          %767 = vmatprep.subr.mxu0 0.0
          %768 = vmatpush1.msra.mxu0 %v628
          %769 = vmatprep.subr.mxu0 0.0
          %770 = vmatpush1.msra.mxu0 %v629
          %771 = vmatprep.mubr.f32.mxu0 %v564
          %772 = vmatmul.mubr.f32.gmra.mrb[0].mxu0 %v562
          %v773 = vpop.f32.mrb[0].mxu0
          %v774 = vadd.f32 %v704, %v773
          %v775 = vpop.f32.mrb[0].mxu0
          %776 = vdwg.mxu0
          %777 = vst [vmem:[#allocation9] sm:$0xff] %v774
        $region60: #{tpu_custom_call.1} parent=39 // pred_fallthru
          _
        // Predicated region
        $region61: #{tpu_custom_call.1} parent=39 // pred_check
          %p778 = pneg %p163
        $region62: #{tpu_custom_call.1} parent=39 // pred_check_branch
          %780 = sbr.rel (%p778) target = $region64
        $region63: #{tpu_custom_call.1} parent=39 // pred_region
          %s782 = ssub.s32 128, 128
          %783 = vsyncadd [#allocation5], %s782
          %s784 = smul.addr %s25, 128
          %s785 = scalar_lea.hbm %s5, %s784
          %s787 = sshll.u32 [#allocation9], 4
          %s788 = int_to_ptr.vmem [resolvable:$true] %s787
          %790 = dma.vmem_to_hbm [thread:$0]  %s788, 128, %s785, [#allocation5]
        $region64: #{tpu_custom_call.1} parent=39 // pred_fallthru
          _
        // Predicated region
        $region65: #{tpu_custom_call.1} parent=39 // pred_check
          %p791 = pneg %p163
        $region66: #{tpu_custom_call.1} parent=39 // pred_check_branch
          %793 = sbr.rel (%p791) target = $region68
        $region67: #{tpu_custom_call.1} parent=39 // pred_region
          %794 = dma.done [#allocation5], 128
        $region68: #{tpu_custom_call.1} parent=39 // pred_fallthru
          _
      $region40: #{tpu_custom_call.1} parent=5 // pred_fallthru
        _
      %p795 = scmp.le.s32.totalorder 2, %s16
      // Predicated region
      $region69: #{tpu_custom_call.1} parent=5 // pred_check
        %p796 = pneg %p795
      $region70: #{tpu_custom_call.1} parent=5 // pred_check_branch
        %798 = sbr.rel (%p796) target = $region72
      $region71: #{tpu_custom_call.1} parent=5 // pred_region
        %s799 = ssub.s32 %s16, 2
      $region72: #{tpu_custom_call.1} parent=5 // pred_fallthru
        _
    $region6: #{tpu_custom_call.1} parent=1 // loop_footer
      %s20 = sadd.s32 1, %s16
    $region7: #{tpu_custom_call.1} parent=1 // loop_footer_branch
      %15 = sbr.rel target = $region3
    $region8: #{tpu_custom_call.1} parent=1 // loop_exit
      _
    %800 = vsyncpa [#allocation4], 1
    %s801 = scalar_lea.sflag [#allocation4], 1
    %802 = vsyncpa %s801, 1
    %803 = vsyncpa [#allocation7], 1
    %804 = vsyncpa [#allocation5], 1
    %s805 = scalar_lea.sflag [#allocation5], 1
    %806 = vsyncpa %s805, 1

</llo_original>
